<compile_context>
chip_gen: v6e
topology: v6e:2x2x1
jax: 0.10.0
libtpu: 0.0.40
codegen_flags: <defaults>
</compile_context>

<pallas_src>
import functools

import jax
import jax.numpy as jnp
from jax.experimental import pallas as pl
from jax.experimental.pallas import tpu as pltpu


# ----------------------------- tiling helpers ------------------------------ #

_BLOCK_BYTES = 4 * 1024 * 1024        # per-array block budget; safe on v5e/v6e/v7x
_VMEM_LIMIT_BYTES = 48 * 1024 * 1024  # explicit scoped-VMEM limit (all generations)


def _cdiv(a, b):
    return (a + b - 1) // b


def _plan(B, T, C, itemsize, block_bytes):
    """Return (BB, Tt, TC, fused) tiling plan (all static Python ints)."""
    tc_min = C if C <= 128 else 128
    fused = T * tc_min * itemsize <= block_bytes

    if fused:
        if C <= 128:
            tc = C
        else:
            units = max(1, min(_cdiv(C, 128), block_bytes // (T * 128 * itemsize)))
            tc = C if units * 128 >= C else units * 128
        bb = max(1, min(B, block_bytes // (T * tc * itemsize)))
        tt = T
    else:
        # Long-sequence fallback: tile T (multiple of 8), keep channel tile minimal.
        tc = tc_min
        tt = max(8, min(T, (block_bytes // (tc * itemsize)) // 8 * 8))
        bb = 1

    # v7x has 2 TensorCores sharing HBM bandwidth: make sure the parallel axes of
    # the grid have at least 2 steps when possible so both cores get work.
    if _cdiv(B, bb) * _cdiv(C, tc) == 1 and B >= 2:
        bb = (B + 1) // 2
    return bb, tt, tc, fused


# ----------------------------- kernels ------------------------------------- #

def _revin_norm_fused_kernel(x_ref, w_ref, b_ref, y_ref, mean_ref, std_ref,
                             *, eps, affine, inv_t):
    # x_ref: (BB, T, TC)    w_ref/b_ref: (1, TC)
    x = x_ref[...].astype(jnp.float32)

    mean = jnp.sum(x, axis=1, keepdims=True) * inv_t              # (BB, 1, TC)
    xc = x - mean
    # Two-pass variance: matches torch.var(unbiased=False) numerics and avoids the
    # E[x^2]-mean^2 cancellation. x is already resident in VMEM, so the extra pass
    # is pure VPU work with no extra HBM traffic.
    var = jnp.sum(xc * xc, axis=1, keepdims=True) * inv_t
    inv_std = jax.lax.rsqrt(var + eps)                            # EUP, tiny tile
    std = (var + eps) * inv_std                                   # == sqrt(var+eps)

    if affine:
        w = w_ref[...][:, None, :].astype(jnp.float32)            # (1, 1, TC)
        b = b_ref[...][:, None, :].astype(jnp.float32)
        y = xc * (w * inv_std) + b                                # single FMA on slab
    else:
        y = xc * inv_std

    y_ref[...] = y.astype(y_ref.dtype)
    mean_ref[...] = mean.astype(mean_ref.dtype)
    std_ref[...] = std.astype(std_ref.dtype)


def _revin_stats_kernel(x_ref, mean_ref, std_ref, s1_ref, s2_ref,
                        *, eps, inv_t, t_total, t_tile, ragged_t):
    # Long-sequence path: accumulate sum / sum-of-squares over the T grid axis.
    t = pl.program_id(2)

    @pl.when(t == 0)
    def _():
        s1_ref[...] = jnp.zeros_like(s1_ref)
        s2_ref[...] = jnp.zeros_like(s2_ref)

    x = x_ref[...].astype(jnp.float32)                            # (BB, Tt, TC)
    if ragged_t:
        # Mask rows past the true sequence end in the final partial T block so the
        # reduction over T is not contaminated by stale VMEM data.
        rows = jax.lax.broadcasted_iota(jnp.int32, x.shape, 1)
        x = jnp.where(rows < (t_total - t * t_tile), x, 0.0)

    s1_ref[...] += jnp.sum(x, axis=1, keepdims=True)
    s2_ref[...] += jnp.sum(x * x, axis=1, keepdims=True)

    @pl.when(t == pl.num_programs(2) - 1)
    def _():
        mean = s1_ref[...] * inv_t
        # One-pass variance here (the x blocks are already gone); acceptable for
        # the long-sequence fallback, clamped at 0 against cancellation.
        var = jnp.maximum(s2_ref[...] * inv_t - mean * mean, 0.0)
        inv_std = jax.lax.rsqrt(var + eps)
        mean_ref[...] = mean.astype(mean_ref.dtype)
        std_ref[...] = ((var + eps) * inv_std).astype(std_ref.dtype)


def _revin_apply_kernel(x_ref, mean_ref, std_ref, w_ref, b_ref, y_ref,
                        *, eps, affine):
    # Elementwise normalize with precomputed stats (long-sequence path).
    x = x_ref[...].astype(jnp.float32)                            # (BB, Tt, TC)
    mean = mean_ref[...].astype(jnp.float32)                      # (BB, 1, TC)
    std = std_ref[...].astype(jnp.float32)
    inv_std = 1.0 / std                                           # tiny stats tile

    if affine:
        w = w_ref[...][:, None, :].astype(jnp.float32)
        b = b_ref[...][:, None, :].astype(jnp.float32)
        scale = w * inv_std
        offset = b - mean * scale
    else:
        scale = inv_std
        offset = -mean * scale

    y_ref[...] = (x * scale + offset).astype(y_ref.dtype)


def _revin_denorm_kernel(x_ref, mean_ref, std_ref, w_ref, b_ref, y_ref,
                         *, eps, affine):
    x = x_ref[...].astype(jnp.float32)                            # (BB, Tt, TC)
    mean = mean_ref[...].astype(jnp.float32)                      # (BB, 1, TC)
    std = std_ref[...].astype(jnp.float32)

    if affine:
        w = w_ref[...][:, None, :].astype(jnp.float32)
        b = b_ref[...][:, None, :].astype(jnp.float32)
        scale = std / (w + eps * eps)                             # tiny-tile divide
        offset = mean - b * scale
    else:
        scale = std
        offset = mean

    y_ref[...] = (x * scale + offset).astype(y_ref.dtype)


# ----------------------------- wrappers ------------------------------------ #

def revin_norm(x, weight, bias, *, eps=1e-5, affine=True, block_bytes=_BLOCK_BYTES):
    """x: (B, T, C). Returns (y, mean, stdev), mean/stdev of shape (B, 1, C)."""
    B, T, C = x.shape
    itemsize = jnp.dtype(x.dtype).itemsize
    bb, tt, tc, fused = _plan(B, T, C, itemsize, block_bytes)
    gb, gc, gt = _cdiv(B, bb), _cdiv(C, tc), _cdiv(T, tt)

    w2 = weight.reshape(1, C).astype(jnp.float32)
    b2 = bias.reshape(1, C).astype(jnp.float32)

    if fused:
        kernel = functools.partial(_revin_norm_fused_kernel, eps=float(eps),
                                   affine=affine, inv_t=1.0 / T)
        y, mean, std = pl.pallas_call(
            kernel,
            out_shape=(
                jax.ShapeDtypeStruct((B, T, C), x.dtype),
                jax.ShapeDtypeStruct((B, 1, C), jnp.float32),
                jax.ShapeDtypeStruct((B, 1, C), jnp.float32),
            ),
            grid_spec=pltpu.PrefetchScalarGridSpec(
                num_scalar_prefetch=0,
                grid=(gb, gc),
                in_specs=[
                    pl.BlockSpec((bb, T, tc), lambda bi, ci: (bi, 0, ci)),
                    pl.BlockSpec((1, tc), lambda bi, ci: (0, ci)),
                    pl.BlockSpec((1, tc), lambda bi, ci: (0, ci)),
                ],
                out_specs=[
                    pl.BlockSpec((bb, T, tc), lambda bi, ci: (bi, 0, ci)),
                    pl.BlockSpec((bb, 1, tc), lambda bi, ci: (bi, 0, ci)),
                    pl.BlockSpec((bb, 1, tc), lambda bi, ci: (bi, 0, ci)),
                ],
            ),
            compiler_params=pltpu.CompilerParams(
                dimension_semantics=("parallel", "parallel"),
                vmem_limit_bytes=_VMEM_LIMIT_BYTES),
        )(x, w2, b2)
        return y, mean, std

    # ---- long-sequence fallback: stats sweep over T, then elementwise apply ----
    stats_kernel = functools.partial(
        _revin_stats_kernel, eps=float(eps), inv_t=1.0 / T,
        t_total=T, t_tile=tt, ragged_t=(T % tt != 0))
    mean, std = pl.pallas_call(
        stats_kernel,
        out_shape=(
            jax.ShapeDtypeStruct((B, 1, C), jnp.float32),
            jax.ShapeDtypeStruct((B, 1, C), jnp.float32),
        ),
        grid_spec=pltpu.PrefetchScalarGridSpec(
            num_scalar_prefetch=0,
            grid=(gb, gc, gt),
            in_specs=[pl.BlockSpec((bb, tt, tc), lambda bi, ci, ti: (bi, ti, ci))],
            out_specs=[
                pl.BlockSpec((bb, 1, tc), lambda bi, ci, ti: (bi, 0, ci)),
                pl.BlockSpec((bb, 1, tc), lambda bi, ci, ti: (bi, 0, ci)),
            ],
            scratch_shapes=[
                pltpu.VMEM((bb, 1, tc), jnp.float32),
                pltpu.VMEM((bb, 1, tc), jnp.float32),
            ],
        ),
        compiler_params=pltpu.CompilerParams(
            dimension_semantics=("parallel", "parallel", "arbitrary"),
            vmem_limit_bytes=_VMEM_LIMIT_BYTES),
    )(x)

    apply_kernel = functools.partial(_revin_apply_kernel, eps=float(eps), affine=affine)
    y = pl.pallas_call(
        apply_kernel,
        out_shape=jax.ShapeDtypeStruct((B, T, C), x.dtype),
        grid_spec=pltpu.PrefetchScalarGridSpec(
            num_scalar_prefetch=0,
            grid=(gb, gc, gt),
            in_specs=[
                pl.BlockSpec((bb, tt, tc), lambda bi, ci, ti: (bi, ti, ci)),
                pl.BlockSpec((bb, 1, tc), lambda bi, ci, ti: (bi, 0, ci)),
                pl.BlockSpec((bb, 1, tc), lambda bi, ci, ti: (bi, 0, ci)),
                pl.BlockSpec((1, tc), lambda bi, ci, ti: (0, ci)),
                pl.BlockSpec((1, tc), lambda bi, ci, ti: (0, ci)),
            ],
            out_specs=pl.BlockSpec((bb, tt, tc), lambda bi, ci, ti: (bi, ti, ci)),
        ),
        compiler_params=pltpu.CompilerParams(
            dimension_semantics=("parallel", "parallel", "parallel"),
            vmem_limit_bytes=_VMEM_LIMIT_BYTES),
    )(x, mean, std, w2, b2)
    return y, mean, std


def revin_denorm(x, mean, std, weight, bias, *, eps=1e-5, affine=True,
                 block_bytes=_BLOCK_BYTES):
    """x: (B, T, C), mean/std: (B, 1, C). Returns denormalized (B, T, C)."""
    B, T, C = x.shape
    itemsize = jnp.dtype(x.dtype).itemsize
    bb, tt, tc, _ = _plan(B, T, C, itemsize, block_bytes)
    gb, gc, gt = _cdiv(B, bb), _cdiv(C, tc), _cdiv(T, tt)

    w2 = weight.reshape(1, C).astype(jnp.float32)
    b2 = bias.reshape(1, C).astype(jnp.float32)
    m3 = mean.reshape(B, 1, C).astype(jnp.float32)
    s3 = std.reshape(B, 1, C).astype(jnp.float32)

    kernel = functools.partial(_revin_denorm_kernel, eps=float(eps), affine=affine)
    y = pl.pallas_call(
        kernel,
        out_shape=jax.ShapeDtypeStruct((B, T, C), x.dtype),
        grid_spec=pltpu.PrefetchScalarGridSpec(
            num_scalar_prefetch=0,
            grid=(gb, gc, gt),
            in_specs=[
                pl.BlockSpec((bb, tt, tc), lambda bi, ci, ti: (bi, ti, ci)),
                pl.BlockSpec((bb, 1, tc), lambda bi, ci, ti: (bi, 0, ci)),
                pl.BlockSpec((bb, 1, tc), lambda bi, ci, ti: (bi, 0, ci)),
                pl.BlockSpec((1, tc), lambda bi, ci, ti: (0, ci)),
                pl.BlockSpec((1, tc), lambda bi, ci, ti: (0, ci)),
            ],
            out_specs=pl.BlockSpec((bb, tt, tc), lambda bi, ci, ti: (bi, ti, ci)),
        ),
        compiler_params=pltpu.CompilerParams(
            dimension_semantics=("parallel", "parallel", "parallel"),
            vmem_limit_bytes=_VMEM_LIMIT_BYTES),
    )(x, m3, s3, w2, b2)
    return y


class RevIN:
    """JAX/Pallas port of the PyTorch RevIN module (subtract_last=False path)."""

    def __init__(self, num_features: int, eps=1e-5, affine=True, subtract_last=False):
        self.num_features = num_features
        self.eps = eps
        self.affine = affine
        self.subtract_last = subtract_last
        if subtract_last:
            # TODO(synk): subtract_last=True path (uses x[:, -1, :] instead of mean) not wired up.
            raise NotImplementedError("subtract_last=True not implemented in Pallas port")
        # Deterministic init, matching nn.Parameter(torch.ones/zeros(num_features)).
        self.affine_weight = jnp.ones((num_features,), jnp.float32)
        self.affine_bias = jnp.zeros((num_features,), jnp.float32)
        self.mean = None
        self.stdev = None

    def __call__(self, x, mode: str):
        if mode == "norm":
            y, self.mean, self.stdev = revin_norm(
                x, self.affine_weight, self.affine_bias,
                eps=self.eps, affine=self.affine)
            return y
        elif mode == "denorm":
            return revin_denorm(
                x, self.mean, self.stdev, self.affine_weight, self.affine_bias,
                eps=self.eps, affine=self.affine)
        else:
            raise NotImplementedError


# ------------------------------- main --------------------------------------- #

if __name__ == "__main__":
    B, T, C = 2, 8, 32
    key = jax.random.PRNGKey(0)
    k1, k2 = jax.random.split(key)
    x = jax.random.normal(k1, (B, T, C), jnp.float32) * 3.0 + 1.5

    layer = RevIN(num_features=C, eps=1e-5, affine=True, subtract_last=False)

    y = jax.block_until_ready(layer(x, "norm"))
    x_rec = jax.block_until_ready(layer(x=y, mode="denorm"))

    # Pure-JAX reference of the 'norm' path (weight=1, bias=0).
    mean_ref = jnp.mean(x, axis=1, keepdims=True)
    var_ref = jnp.var(x, axis=1, keepdims=True)
    std_ref = jnp.sqrt(var_ref + 1e-5)
    y_ref = (x - mean_ref) / std_ref
    assert jnp.allclose(y, y_ref, atol=1e-4, rtol=1e-4), "norm mismatch"
    assert jnp.allclose(layer.mean, mean_ref, atol=1e-5, rtol=1e-5), "mean mismatch"
    assert jnp.allclose(layer.stdev, std_ref, atol=1e-4, rtol=1e-4), "stdev mismatch"
    # denorm(norm(x)) should reconstruct x (up to the eps^2 affine guard).
    assert jnp.allclose(x_rec, x, atol=1e-3, rtol=1e-3), "denorm mismatch"

    # Exercise the long-sequence (T-tiled, two-pass) path by forcing a tiny block
    # budget, including a ragged final T block (60 % 16 != 0).
    B2, T2, C2 = 2, 60, 32
    x2 = jax.random.normal(k2, (B2, T2, C2), jnp.float32) * 2.0 - 0.5
    w = jnp.ones((C2,), jnp.float32)
    b = jnp.zeros((C2,), jnp.float32)
    y2, m2, s2 = revin_norm(x2, w, b, eps=1e-5, affine=True, block_bytes=2048)
    y2 = jax.block_until_ready(y2)
    m_ref2 = jnp.mean(x2, axis=1, keepdims=True)
    s_ref2 = jnp.sqrt(jnp.var(x2, axis=1, keepdims=True) + 1e-5)
    y_ref2 = (x2 - m_ref2) / s_ref2
    assert jnp.allclose(y2, y_ref2, atol=1e-3, rtol=1e-3), "tiled norm mismatch"
    assert jnp.allclose(m2, m_ref2, atol=1e-4, rtol=1e-4), "tiled mean mismatch"
    assert jnp.allclose(s2, s_ref2, atol=1e-3, rtol=1e-3), "tiled stdev mismatch"
    x2_rec = jax.block_until_ready(
        revin_denorm(y2, m2, s2, w, b, eps=1e-5, affine=True, block_bytes=2048))
    assert jnp.allclose(x2_rec, x2, atol=1e-3, rtol=1e-3), "tiled denorm mismatch"

    print("KERNEL_OK")
</pallas_src>

<mosaic_0001>
module attributes {stable_mosaic.version = 11 : i64} {
  func.func @_revin_norm_fused_kernel(%arg0: i32, %arg1: i32, %arg2: memref<1x8x32xf32, #tpu.memory_space<vmem>>, %arg3: memref<1x32xf32, #tpu.memory_space<vmem>>, %arg4: memref<1x32xf32, #tpu.memory_space<vmem>>, %arg5: memref<1x8x32xf32, #tpu.memory_space<vmem>>, %arg6: memref<1x1x32xf32, #tpu.memory_space<vmem>>, %arg7: memref<1x1x32xf32, #tpu.memory_space<vmem>>) attributes {dimension_semantics = [#tpu.dimension_semantics<parallel>, #tpu.dimension_semantics<parallel>], iteration_bounds = array<i64: 2, 1>, scalar_prefetch = 0 : i64, scratch_operands = 0 : i64, tpu.core_type = #tpu.core_type<tc>, window_params = [{transform_indices = @transform_0, window_bounds = array<i64: 1, 8, 32>}, {transform_indices = @transform_1, window_bounds = array<i64: 1, 32>}, {transform_indices = @transform_2, window_bounds = array<i64: 1, 32>}, {transform_indices = @transform_3, window_bounds = array<i64: 1, 8, 32>}, {transform_indices = @transform_4, window_bounds = array<i64: 1, 1, 32>}, {transform_indices = @transform_5, window_bounds = array<i64: 1, 1, 32>}]} {
    %c0 = arith.constant 0 : index
    %c0_0 = arith.constant 0 : index
    %c0_1 = arith.constant 0 : index
    %0 = vector.load %arg2[%c0, %c0_0, %c0_1] : memref<1x8x32xf32, #tpu.memory_space<vmem>>, vector<1x8x32xf32>
    %cst = arith.constant dense<0.000000e+00> : vector<1x32xf32>
    %1 = vector.multi_reduction <add>, %0, %cst [1] : vector<1x8x32xf32> to vector<1x32xf32>
    %2 = vector.shape_cast %1 : vector<1x32xf32> to vector<1x1x32xf32>
    %cst_2 = arith.constant 1.250000e-01 : f32
    %3 = vector.broadcast %cst_2 : f32 to vector<1x1x32xf32>
    %4 = arith.mulf %2, %3 : vector<1x1x32xf32>
    %5 = vector.broadcast %4 : vector<1x1x32xf32> to vector<1x8x32xf32>
    %6 = arith.subf %0, %5 : vector<1x8x32xf32>
    %7 = arith.mulf %6, %6 : vector<1x8x32xf32>
    %cst_3 = arith.constant dense<0.000000e+00> : vector<1x32xf32>
    %8 = vector.multi_reduction <add>, %7, %cst_3 [1] : vector<1x8x32xf32> to vector<1x32xf32>
    %9 = vector.shape_cast %8 : vector<1x32xf32> to vector<1x1x32xf32>
    %cst_4 = arith.constant 1.250000e-01 : f32
    %10 = vector.broadcast %cst_4 : f32 to vector<1x1x32xf32>
    %11 = arith.mulf %9, %10 : vector<1x1x32xf32>
    %cst_5 = arith.constant 9.99999974E-6 : f32
    %12 = vector.broadcast %cst_5 : f32 to vector<1x1x32xf32>
    %13 = arith.addf %11, %12 : vector<1x1x32xf32>
    %14 = math.rsqrt %13 : vector<1x1x32xf32>
    %cst_6 = arith.constant 9.99999974E-6 : f32
    %15 = vector.broadcast %cst_6 : f32 to vector<1x1x32xf32>
    %16 = arith.addf %11, %15 : vector<1x1x32xf32>
    %17 = arith.mulf %16, %14 : vector<1x1x32xf32>
    %c0_7 = arith.constant 0 : index
    %c0_8 = arith.constant 0 : index
    %18 = vector.load %arg3[%c0_7, %c0_8] : memref<1x32xf32, #tpu.memory_space<vmem>>, vector<1x32xf32>
    %19 = vector.shape_cast %18 : vector<1x32xf32> to vector<1x1x32xf32>
    %c0_9 = arith.constant 0 : index
    %c0_10 = arith.constant 0 : index
    %20 = vector.load %arg4[%c0_9, %c0_10] : memref<1x32xf32, #tpu.memory_space<vmem>>, vector<1x32xf32>
    %21 = vector.shape_cast %20 : vector<1x32xf32> to vector<1x1x32xf32>
    %22 = arith.mulf %19, %14 : vector<1x1x32xf32>
    %23 = vector.broadcast %22 : vector<1x1x32xf32> to vector<1x8x32xf32>
    %24 = arith.mulf %6, %23 : vector<1x8x32xf32>
    %25 = vector.broadcast %21 : vector<1x1x32xf32> to vector<1x8x32xf32>
    %26 = arith.addf %24, %25 : vector<1x8x32xf32>
    %c0_11 = arith.constant 0 : index
    %c0_12 = arith.constant 0 : index
    %c0_13 = arith.constant 0 : index
    %27 = vector.load %arg5[%c0_11, %c0_12, %c0_13] : memref<1x8x32xf32, #tpu.memory_space<vmem>>, vector<1x8x32xf32>
    tpu.vector_store %arg5[%c0_11, %c0_12, %c0_13], %26 {strides = array<i32>} : memref<1x8x32xf32, #tpu.memory_space<vmem>>, vector<1x8x32xf32>,
    %c0_14 = arith.constant 0 : index
    %c0_15 = arith.constant 0 : index
    %c0_16 = arith.constant 0 : index
    %28 = vector.load %arg6[%c0_14, %c0_15, %c0_16] : memref<1x1x32xf32, #tpu.memory_space<vmem>>, vector<1x1x32xf32>
    tpu.vector_store %arg6[%c0_14, %c0_15, %c0_16], %4 {strides = array<i32>} : memref<1x1x32xf32, #tpu.memory_space<vmem>>, vector<1x1x32xf32>,
    %c0_17 = arith.constant 0 : index
    %c0_18 = arith.constant 0 : index
    %c0_19 = arith.constant 0 : index
    %29 = vector.load %arg7[%c0_17, %c0_18, %c0_19] : memref<1x1x32xf32, #tpu.memory_space<vmem>>, vector<1x1x32xf32>
    tpu.vector_store %arg7[%c0_17, %c0_18, %c0_19], %17 {strides = array<i32>} : memref<1x1x32xf32, #tpu.memory_space<vmem>>, vector<1x1x32xf32>,
    return
  }
  func.func @transform_0(%arg0: i32, %arg1: i32) -> (i32, i32, i32) {
    %c0_i32 = arith.constant 0 : i32
    %c0_i32_0 = arith.constant 0 : i32
    return %arg0, %c0_i32, %arg1 : i32, i32, i32
  }
  func.func @transform_1(%arg0: i32, %arg1: i32) -> (i32, i32) {
    %c0_i32 = arith.constant 0 : i32
    %c0_i32_0 = arith.constant 0 : i32
    return %c0_i32, %arg1 : i32, i32
  }
  func.func @transform_2(%arg0: i32, %arg1: i32) -> (i32, i32) {
    %c0_i32 = arith.constant 0 : i32
    %c0_i32_0 = arith.constant 0 : i32
    return %c0_i32, %arg1 : i32, i32
  }
  func.func @transform_3(%arg0: i32, %arg1: i32) -> (i32, i32, i32) {
    %c0_i32 = arith.constant 0 : i32
    %c0_i32_0 = arith.constant 0 : i32
    return %arg0, %c0_i32, %arg1 : i32, i32, i32
  }
  func.func @transform_4(%arg0: i32, %arg1: i32) -> (i32, i32, i32) {
    %c0_i32 = arith.constant 0 : i32
    %c0_i32_0 = arith.constant 0 : i32
    return %arg0, %c0_i32, %arg1 : i32, i32, i32
  }
  func.func @transform_5(%arg0: i32, %arg1: i32) -> (i32, i32, i32) {
    %c0_i32 = arith.constant 0 : i32
    %c0_i32_0 = arith.constant 0 : i32
    return %arg0, %c0_i32, %arg1 : i32, i32, i32
  }
}

</mosaic_0001>

<llo_original>
// kernel: tpu_custom_call.1
$region0: #{tpu_custom_call.1}
  #allocation0 [shape = 'u32[]', space=smem, size = 0x4, offset = 0x4, fixed_abs, tag = 'smem constant byte address 0x4 - core index']
  #allocation1 [shape = 'u32[144,128]{1,0:T(1,128)}', space=vmem, size = 0x12000, scoped, tag = 'internal scratch']
  %s0 = inlined_call_operand.hbm [shape: f32[2,8,32], index: 0, kind: input, shape index: {}]
  %s1 = inlined_call_operand.vmem [shape: f32[1,32], index: 1, kind: input, shape index: {}]
  %s2 = inlined_call_operand.vmem [shape: f32[1,32], index: 2, kind: input, shape index: {}]
  %s3 = inlined_call_operand.hbm [shape: f32[2,8,32], index: 3, kind: output, shape index: {0}]
  %s4 = inlined_call_operand.hbm [shape: f32[2,1,32], index: 4, kind: output, shape index: {1}]
  %s5 = inlined_call_operand.hbm [shape: f32[2,1,32], index: 5, kind: output, shape index: {2}]
  %6 = xla_tuple %s3, %s4, %s5
  %s7 = sld [smem:[#allocation0]]
  $region65: #{tpu_custom_call.1} parent=0
    _
  %s9 = ssub.s32 1, %s7
  %s10 = scalar_select 0, %s9, %s7
  $region1: #{tpu_custom_call.1} parent=0
    #allocation2 [shape = 'u8[8192]{0}', space=vmem, size = 0x2000, scoped, tag = 'input window, operand 0']
    #allocation3 [shape = 's32[2]{0}', space=sflag, size = 0x8, scoped, tag = 'scoped memory for tpu_custom_call.1']
    #allocation4 [shape = 's32[2]{0}', space=sflag, size = 0x8, scoped, tag = 'scoped memory for tpu_custom_call.1']
    #allocation5 [shape = 'u8[8192]{0}', space=vmem, size = 0x2000, scoped, tag = 'output window, operand 0']
    #allocation6 [shape = 'u8[1024]{0}', space=vmem, size = 0x400, scoped, tag = 'output window, operand 1']
    #allocation7 [shape = 's32[2]{0}', space=sflag, size = 0x8, scoped, tag = 'scoped memory for tpu_custom_call.1']
    #allocation8 [shape = 'u8[1024]{0}', space=vmem, size = 0x400, scoped, tag = 'output window, operand 2']
    %11 = vsyncpa [#allocation3], 0
    %s12 = scalar_lea.sflag [#allocation3], 1
    %13 = vsyncpa %s12, 0
    %14 = vsyncpa [#allocation4], 0
    %s15 = scalar_lea.sflag [#allocation4], 1
    %16 = vsyncpa %s15, 0
    %17 = vsyncpa [#allocation7], 0
    %s18 = scalar_lea.sflag [#allocation7], 1
    %19 = vsyncpa %s18, 0
    loop: start=0, step=1, limit=4
    $region2: #{tpu_custom_call.1} parent=1 // loop_pre_header
      _
    $region3: #{tpu_custom_call.1} parent=1 // loop_header
      %s21 = sphi 0, %s25
      %p22 = scmp.ge.s32.totalorder %s21, 4
      %s28 = sphi 0, %s40
      %s29 = sphi 0, %s36
      %s30 = sphi 0, %s28
      %s31 = sphi 0, %s29
      %s32 = sphi 0, %s30
      %s33 = sphi 0, %s31
      %s45 = sphi 0, %s47
      %s48 = sphi 0, %s45
      %s49 = sphi 0, %s48
      %s65 = sphi 0, %s49
      %s71 = sphi 0, %s73
      %s74 = sphi 0, %s71
      %s75 = sphi 0, %s74
      %s91 = sphi 0, %s75
      %s97 = sphi 0, %s99
      %s100 = sphi 0, %s97
      %s101 = sphi 0, %s100
      %s117 = sphi 0, %s101
      %s125 = sphi 0, %s127
      %s128 = sphi 0, %s125
      %s129 = sphi 0, %s128
      %s145 = sphi 0, %s129
      %s153 = sphi 0, %s155
      %s156 = sphi 0, %s153
      %s157 = sphi 0, %s156
      %s173 = sphi 0, %s157
      %s181 = sphi 0, %s183
      %s184 = sphi 0, %s181
      %s185 = sphi 0, %s184
      %s201 = sphi 0, %s185
    $region4: #{tpu_custom_call.1} parent=1 // loop_header_branch
      %24 = sbr.rel (%p22) target = $region8
    $region5: #{tpu_custom_call.1} parent=1 // loop_body
      %s26 = ssub.s32 %s21, 1
      %s27 = ssub.s32 %s21, 2
      %s34 = sadd.s32 1, %s29
      %p35 = scmp.ge.s32.totalorder %s34, 1
      %s36 = scalar_select %p35, 0, %s34
      %s37 = sadd.s32 1, %s28
      %s38 = scalar_select %p35, %s37, %s28
      %p39 = scmp.ge.s32.totalorder %s38, 2
      %s40 = scalar_select %p39, 0, %s38
      %s41 = ssub.s32 %s28, %s40
      %s42 = ssub.s32 %s29, %s36
      %s43 = sor.u32 %s41, %s42
      %p44 = scmp.eq.s32.totalorder %s43, 0
      %s46 = sadd.s32 %s45, 1
      %s47 = scalar_select %p44, %s45, %s46
      %p50 = pneg %p44
      %p51 = scmp.eq.s32.totalorder %s21, 1
      %p52 = por %p50, %p51
      %p53 = scmp.ne.s32.totalorder %s45, %s48
      %p54 = scmp.eq.s32.totalorder %s21, 0
      %p55 = por %p53, %p54
      %p56 = scmp.ne.s32.totalorder %s45, %s48
      %p57 = scmp.eq.s32.totalorder %s26, 1
      %p58 = por %p56, %p57
      %p59 = scmp.ne.s32.totalorder %s48, %s49
      %p60 = scmp.eq.s32.totalorder %s26, 0
      %p61 = por %p59, %p60
      %p62 = scmp.ne.s32.totalorder %s48, %s49
      %p63 = scmp.eq.s32.totalorder %s27, 1
      %p64 = por %p62, %p63
      %p66 = scmp.ne.s32.totalorder %s49, %s65
      %p67 = scmp.eq.s32.totalorder %s27, 0
      %p68 = por %p66, %p67
      %s69 = ssub.s32 %s29, %s36
      %p70 = scmp.eq.s32.totalorder %s69, 0
      %s72 = sadd.s32 %s71, 1
      %s73 = scalar_select %p70, %s71, %s72
      %p76 = pneg %p70
      %p77 = scmp.eq.s32.totalorder %s21, 1
      %p78 = por %p76, %p77
      %p79 = scmp.ne.s32.totalorder %s71, %s74
      %p80 = scmp.eq.s32.totalorder %s21, 0
      %p81 = por %p79, %p80
      %p82 = scmp.ne.s32.totalorder %s71, %s74
      %p83 = scmp.eq.s32.totalorder %s26, 1
      %p84 = por %p82, %p83
      %p85 = scmp.ne.s32.totalorder %s74, %s75
      %p86 = scmp.eq.s32.totalorder %s26, 0
      %p87 = por %p85, %p86
      %p88 = scmp.ne.s32.totalorder %s74, %s75
      %p89 = scmp.eq.s32.totalorder %s27, 1
      %p90 = por %p88, %p89
      %p92 = scmp.ne.s32.totalorder %s75, %s91
      %p93 = scmp.eq.s32.totalorder %s27, 0
      %p94 = por %p92, %p93
      %s95 = ssub.s32 %s29, %s36
      %p96 = scmp.eq.s32.totalorder %s95, 0
      %s98 = sadd.s32 %s97, 1
      %s99 = scalar_select %p96, %s97, %s98
      %p102 = pneg %p96
      %p103 = scmp.eq.s32.totalorder %s21, 1
      %p104 = por %p102, %p103
      %p105 = scmp.ne.s32.totalorder %s97, %s100
      %p106 = scmp.eq.s32.totalorder %s21, 0
      %p107 = por %p105, %p106
      %p108 = scmp.ne.s32.totalorder %s97, %s100
      %p109 = scmp.eq.s32.totalorder %s26, 1
      %p110 = por %p108, %p109
      %p111 = scmp.ne.s32.totalorder %s100, %s101
      %p112 = scmp.eq.s32.totalorder %s26, 0
      %p113 = por %p111, %p112
      %p114 = scmp.ne.s32.totalorder %s100, %s101
      %p115 = scmp.eq.s32.totalorder %s27, 1
      %p116 = por %p114, %p115
      %p118 = scmp.ne.s32.totalorder %s101, %s117
      %p119 = scmp.eq.s32.totalorder %s27, 0
      %p120 = por %p118, %p119
      %s121 = ssub.s32 %s28, %s40
      %s122 = ssub.s32 %s29, %s36
      %s123 = sor.u32 %s121, %s122
      %p124 = scmp.eq.s32.totalorder %s123, 0
      %s126 = sadd.s32 %s125, 1
      %s127 = scalar_select %p124, %s125, %s126
      %p130 = pneg %p124
      %p131 = scmp.eq.s32.totalorder %s21, 1
      %p132 = por %p130, %p131
      %p133 = scmp.ne.s32.totalorder %s125, %s128
      %p134 = scmp.eq.s32.totalorder %s21, 0
      %p135 = por %p133, %p134
      %p136 = scmp.ne.s32.totalorder %s125, %s128
      %p137 = scmp.eq.s32.totalorder %s26, 1
      %p138 = por %p136, %p137
      %p139 = scmp.ne.s32.totalorder %s128, %s129
      %p140 = scmp.eq.s32.totalorder %s26, 0
      %p141 = por %p139, %p140
      %p142 = scmp.ne.s32.totalorder %s128, %s129
      %p143 = scmp.eq.s32.totalorder %s27, 1
      %p144 = por %p142, %p143
      %p146 = scmp.ne.s32.totalorder %s129, %s145
      %p147 = scmp.eq.s32.totalorder %s27, 0
      %p148 = por %p146, %p147
      %s149 = ssub.s32 %s28, %s40
      %s150 = ssub.s32 %s29, %s36
      %s151 = sor.u32 %s149, %s150
      %p152 = scmp.eq.s32.totalorder %s151, 0
      %s154 = sadd.s32 %s153, 1
      %s155 = scalar_select %p152, %s153, %s154
      %p158 = pneg %p152
      %p159 = scmp.eq.s32.totalorder %s21, 1
      %p160 = por %p158, %p159
      %p161 = scmp.ne.s32.totalorder %s153, %s156
      %p162 = scmp.eq.s32.totalorder %s21, 0
      %p163 = por %p161, %p162
      %p164 = scmp.ne.s32.totalorder %s153, %s156
      %p165 = scmp.eq.s32.totalorder %s26, 1
      %p166 = por %p164, %p165
      %p167 = scmp.ne.s32.totalorder %s156, %s157
      %p168 = scmp.eq.s32.totalorder %s26, 0
      %p169 = por %p167, %p168
      %p170 = scmp.ne.s32.totalorder %s156, %s157
      %p171 = scmp.eq.s32.totalorder %s27, 1
      %p172 = por %p170, %p171
      %p174 = scmp.ne.s32.totalorder %s157, %s173
      %p175 = scmp.eq.s32.totalorder %s27, 0
      %p176 = por %p174, %p175
      %s177 = ssub.s32 %s28, %s40
      %s178 = ssub.s32 %s29, %s36
      %s179 = sor.u32 %s177, %s178
      %p180 = scmp.eq.s32.totalorder %s179, 0
      %s182 = sadd.s32 %s181, 1
      %s183 = scalar_select %p180, %s181, %s182
      %p186 = pneg %p180
      %p187 = scmp.eq.s32.totalorder %s21, 1
      %p188 = por %p186, %p187
      %p189 = scmp.ne.s32.totalorder %s181, %s184
      %p190 = scmp.eq.s32.totalorder %s21, 0
      %p191 = por %p189, %p190
      %p192 = scmp.ne.s32.totalorder %s181, %s184
      %p193 = scmp.eq.s32.totalorder %s26, 1
      %p194 = por %p192, %p193
      %p195 = scmp.ne.s32.totalorder %s184, %s185
      %p196 = scmp.eq.s32.totalorder %s26, 0
      %p197 = por %p195, %p196
      %p198 = scmp.ne.s32.totalorder %s184, %s185
      %p199 = scmp.eq.s32.totalorder %s27, 1
      %p200 = por %p198, %p199
      %p202 = scmp.ne.s32.totalorder %s185, %s201
      %p203 = scmp.eq.s32.totalorder %s27, 0
      %p204 = por %p202, %p203
      %p205 = scmp.le.s32.totalorder 1, %s21
      %p206 = scmp.lt.s32.totalorder %s21, 3
      %p207 = pnand %p205, %p206
      %p208 = pneg %p207
      // Predicated region
      $region9: #{tpu_custom_call.1} parent=5 // pred_check
        _
      $region10: #{tpu_custom_call.1} parent=5 // pred_check_branch
        %210 = sbr.rel (%p207) target = $region12
      $region11: #{tpu_custom_call.1} parent=5 // pred_region
        %s211 = ssub.s32 %s21, 1
        // Predicated region
        $region13: #{tpu_custom_call.1} parent=11 // pred_check
          %p212 = pneg %p87
        $region14: #{tpu_custom_call.1} parent=11 // pred_check_branch
          %214 = sbr.rel (%p212) target = $region16
        $region15: #{tpu_custom_call.1} parent=11 // pred_region
          %p215 = scmp.lt.s32.totalorder %s31, 0
          %s216 = scalar_select %p215, %s31, 0
          %s217 = scalar_lea.vmem %s1, %s216
        $region16: #{tpu_custom_call.1} parent=11 // pred_fallthru
          _
        // Predicated region
        $region17: #{tpu_custom_call.1} parent=11 // pred_check
          %p218 = pneg %p113
        $region18: #{tpu_custom_call.1} parent=11 // pred_check_branch
          %220 = sbr.rel (%p218) target = $region20
        $region19: #{tpu_custom_call.1} parent=11 // pred_region
          %p221 = scmp.lt.s32.totalorder %s31, 0
          %s222 = scalar_select %p221, %s31, 0
          %s223 = scalar_lea.vmem %s2, %s222
        $region20: #{tpu_custom_call.1} parent=11 // pred_fallthru
          _
      $region12: #{tpu_custom_call.1} parent=5 // pred_fallthru
        _
      %p224 = scmp.lt.s32.totalorder %s21, 2
      // Predicated region
      $region21: #{tpu_custom_call.1} parent=5 // pred_check
        %p225 = pneg %p224
      $region22: #{tpu_custom_call.1} parent=5 // pred_check_branch
        %227 = sbr.rel (%p225) target = $region24
      $region23: #{tpu_custom_call.1} parent=5 // pred_region
        // Predicated region
        $region25: #{tpu_custom_call.1} parent=23 // pred_check
          %p228 = pneg %p55
        $region26: #{tpu_custom_call.1} parent=23 // pred_check_branch
          %230 = sbr.rel (%p228) target = $region28
        $region27: #{tpu_custom_call.1} parent=23 // pred_region
          %s231 = sand.u32 %s45, 1
          %s232 = scalar_lea.sflag [#allocation3], %s231
          %s233 = sand.u32 %s45, 1
          %s234 = smul.addr %s233, 8
          %s235 = scalar_lea.vmem [#allocation2], %s234
          %s237 = ssub.s32 128, 128
          %238 = vsyncadd %s232, %s237
          %s239 = sadd.s32 %s29, %s28
          %s240 = smul.addr %s239, 128
          %s241 = scalar_lea.hbm %s0, %s240
          %s243 = sshll.u32 %s235, 4
          %s244 = int_to_ptr.vmem [resolvable:$true] %s243
          %246 = dma.hbm_to_vmem [thread:$0]  %s241, 128, %s244, %s232
        $region28: #{tpu_custom_call.1} parent=23 // pred_fallthru
          _
      $region24: #{tpu_custom_call.1} parent=5 // pred_fallthru
        _
      %p247 = scmp.le.s32.totalorder 1, %s21
      %p248 = scmp.lt.s32.totalorder %s21, 3
      %p249 = pnand %p247, %p248
      %p250 = pneg %p249
      // Predicated region
      $region29: #{tpu_custom_call.1} parent=5 // pred_check
        _
      $region30: #{tpu_custom_call.1} parent=5 // pred_check_branch
        %252 = sbr.rel (%p249) target = $region32
      $region31: #{tpu_custom_call.1} parent=5 // pred_region
        %s253 = ssub.s32 %s21, 1
        %s254 = sand.u32 %s48, 1
        %s255 = scalar_lea.sflag [#allocation3], %s254
        %s256 = sand.u32 %s48, 1
        %s257 = smul.addr %s256, 8
        %s258 = scalar_lea.vmem [#allocation2], %s257
        // Predicated region
        $region33: #{tpu_custom_call.1} parent=31 // pred_check
          %p259 = pneg %p61
        $region34: #{tpu_custom_call.1} parent=31 // pred_check_branch
          %261 = sbr.rel (%p259) target = $region36
        $region35: #{tpu_custom_call.1} parent=31 // pred_region
          %262 = dma.done %s255, 128
        $region36: #{tpu_custom_call.1} parent=31 // pred_fallthru
          _
        %s263 = sand.u32 %s48, 1
        %s264 = scalar_lea.sflag [#allocation3], %s263
        %s265 = sand.u32 %s48, 1
        %s266 = smul.addr %s265, 8
        %s267 = scalar_lea.vmem [#allocation2], %s266
        %p268 = pneg %p61
        %p269 = pneg %p58
        %p270 = scmp.lt.s32.totalorder %s31, 0
        %s271 = scalar_select %p270, %s31, 0
        %s272 = scalar_lea.vmem %s1, %s271
        %p273 = pneg %p87
        %p274 = pneg %p84
        %p275 = scmp.lt.s32.totalorder %s31, 0
        %s276 = scalar_select %p275, %s31, 0
        %s277 = scalar_lea.vmem %s2, %s276
        %p278 = pneg %p113
        %p279 = pneg %p110
        %p280 = pneg %p141
        %p281 = pneg %p138
        %s282 = sand.u32 %s128, 1
        %s283 = scalar_lea.sflag [#allocation4], %s282
        %s284 = sand.u32 %s128, 1
        %s285 = smul.addr %s284, 8
        %s286 = scalar_lea.vmem [#allocation5], %s285
        %p287 = pneg %p169
        %p288 = pneg %p166
        %s289 = sand.u32 %s26, 1
        %s290 = scalar_lea.sflag [#allocation7], %s289
        %s291 = sand.u32 %s156, 1
        %s292 = scalar_lea.vmem [#allocation6], %s291
        %p293 = pneg %p197
        %p294 = pneg %p194
        %s295 = sand.u32 %s26, 1
        %s296 = scalar_lea.sflag [#allocation7], %s295
        %s297 = sand.u32 %s184, 1
        %s298 = scalar_lea.vmem [#allocation8], %s297
        %p299 = scmp.lt.s32.totalorder %s31, 0
        %s300 = scalar_select %p299, %s31, 0
        %s301 = scalar_lea.vmem %s1, %s300
        %p302 = scmp.lt.s32.totalorder %s31, 0
        %s303 = scalar_select %p302, %s31, 0
        %s304 = scalar_lea.vmem %s2, %s303
        %v305 = vld [vmem:[%s258] sm:$0xff]
        %vm306 = vcmask 261120
        %v307 = vsel %vm306, %v305, 0.0
        %v308 = vrot.slane %v307, 4
        %v309 = vadd.f32 %v307, %v308
        %v310 = vrot.slane %v309, 2
        %v311 = vadd.f32 %v309, %v310
        %v312 = vrot.slane %v311, 1
        %v313 = vadd.f32 %v311, %v312
        %v314 = vmul.f32 %v313, 0.125
        %v315 = vsub.f32 %v305, %v314
        %v316 = vmul.f32 %v315, %v315
        %v317 = vsel %vm306, %v316, 0.0
        %v318 = vrot.slane %v317, 4
        %v319 = vadd.f32 %v317, %v318
        %v320 = vrot.slane %v319, 2
        %v321 = vadd.f32 %v319, %v320
        %v322 = vrot.slane %v321, 1
        %v323 = vadd.f32 %v321, %v322
        %v324 = vmul.f32 %v323, 0.125
        %v325 = vadd.f32 %v324, 1e-05
        %v326 = vrsqrt.pop %v325
        %v327 = vmul.f32 %v325, %v326
        %v328 = vld [vmem:[%s301] sm:$0x1]
        %v329 = vld [vmem:[%s304] sm:$0x1]
        %v330 = vmul.f32 %v328, %v326
        %v332 = vlaneseq
        %v333 = vshrl.u32 %v332, 7
        %v334 = vsub.s32 0, %v333
        %v335 = vrot.slane %v330, %v334
        %v337 = vmul.f32 %v315, %v335
        %v339 = vlaneseq
        %v340 = vshrl.u32 %v339, 7
        %v341 = vsub.s32 0, %v340
        %v342 = vrot.slane %v329, %v341
        %v344 = vadd.f32 %v337, %v342
        %345 = vst.msk [vmem:[%s286] sm:$0xff] %vm306, %v344
        %vm346 = vcmask 253952
        %347 = vst.msk [vmem:[%s292] sm:$0x1] %vm346, %v314
        %348 = vst.msk [vmem:[%s298] sm:$0x1] %vm346, %v327
        %s349 = sand.u32 %s128, 1
        %s350 = scalar_lea.sflag [#allocation4], %s349
        %s351 = sand.u32 %s128, 1
        %s352 = smul.addr %s351, 8
        %s353 = scalar_lea.vmem [#allocation5], %s352
        %s354 = sand.u32 %s26, 1
        %s355 = scalar_lea.sflag [#allocation7], %s354
        %s356 = sand.u32 %s156, 1
        %s357 = scalar_lea.vmem [#allocation6], %s356
        %s358 = sand.u32 %s26, 1
        %s359 = scalar_lea.sflag [#allocation7], %s358
        %s360 = sand.u32 %s184, 1
        %s361 = scalar_lea.vmem [#allocation8], %s360
        // Predicated region
        $region37: #{tpu_custom_call.1} parent=31 // pred_check
          %p362 = pneg %p138
        $region38: #{tpu_custom_call.1} parent=31 // pred_check_branch
          %364 = sbr.rel (%p362) target = $region40
        $region39: #{tpu_custom_call.1} parent=31 // pred_region
          %s366 = ssub.s32 128, 128
          %367 = vsyncadd %s350, %s366
          %s368 = sadd.s32 %s31, %s30
          %s369 = smul.addr %s368, 128
          %s370 = scalar_lea.hbm %s3, %s369
          %s372 = sshll.u32 %s353, 4
          %s373 = int_to_ptr.vmem [resolvable:$true] %s372
          %375 = dma.vmem_to_hbm [thread:$0]  %s373, 128, %s370, %s350
        $region40: #{tpu_custom_call.1} parent=31 // pred_fallthru
          _
        // Predicated region
        $region41: #{tpu_custom_call.1} parent=31 // pred_check
          %p376 = pneg %p166
        $region42: #{tpu_custom_call.1} parent=31 // pred_check_branch
          %378 = sbr.rel (%p376) target = $region44
        $region43: #{tpu_custom_call.1} parent=31 // pred_region
          %s380 = ssub.s32 16, 16
          %381 = vsyncadd %s355, %s380
          %s382 = sadd.s32 %s31, %s30
          %s383 = smul.addr %s382, 16
          %s384 = scalar_lea.hbm %s4, %s383
          %s386 = sshll.u32 %s357, 4
          %s387 = int_to_ptr.vmem [resolvable:$true] %s386
          %389 = dma.vmem_to_hbm [thread:$0]  %s387, 16, %s384, %s355
        $region44: #{tpu_custom_call.1} parent=31 // pred_fallthru
          _
        // Predicated region
        $region45: #{tpu_custom_call.1} parent=31 // pred_check
          %p390 = pneg %p194
        $region46: #{tpu_custom_call.1} parent=31 // pred_check_branch
          %392 = sbr.rel (%p390) target = $region48
        $region47: #{tpu_custom_call.1} parent=31 // pred_region
          %s394 = ssub.s32 16, 16
          %395 = vsyncadd %s359, %s394
          %s396 = sadd.s32 %s31, %s30
          %s397 = smul.addr %s396, 16
          %s398 = scalar_lea.hbm %s5, %s397
          %s400 = sshll.u32 %s361, 4
          %s401 = int_to_ptr.vmem [resolvable:$true] %s400
          %403 = dma.vmem_to_hbm [thread:$0]  %s401, 16, %s398, %s359
        $region48: #{tpu_custom_call.1} parent=31 // pred_fallthru
          _
      $region32: #{tpu_custom_call.1} parent=5 // pred_fallthru
        _
      %p404 = scmp.le.s32.totalorder 2, %s21
      // Predicated region
      $region49: #{tpu_custom_call.1} parent=5 // pred_check
        %p405 = pneg %p404
      $region50: #{tpu_custom_call.1} parent=5 // pred_check_branch
        %407 = sbr.rel (%p405) target = $region52
      $region51: #{tpu_custom_call.1} parent=5 // pred_region
        %s408 = ssub.s32 %s21, 2
        // Predicated region
        $region53: #{tpu_custom_call.1} parent=51 // pred_check
          %p409 = pneg %p144
        $region54: #{tpu_custom_call.1} parent=51 // pred_check_branch
          %411 = sbr.rel (%p409) target = $region56
        $region55: #{tpu_custom_call.1} parent=51 // pred_region
          %s412 = sand.u32 %s129, 1
          %s413 = scalar_lea.sflag [#allocation4], %s412
          %s414 = sand.u32 %s129, 1
          %s415 = smul.addr %s414, 8
          %s416 = scalar_lea.vmem [#allocation5], %s415
          %417 = dma.done %s413, 128
        $region56: #{tpu_custom_call.1} parent=51 // pred_fallthru
          _
        // Predicated region
        $region57: #{tpu_custom_call.1} parent=51 // pred_check
          %p418 = pneg %p172
        $region58: #{tpu_custom_call.1} parent=51 // pred_check_branch
          %420 = sbr.rel (%p418) target = $region60
        $region59: #{tpu_custom_call.1} parent=51 // pred_region
          %s421 = sand.u32 %s27, 1
          %s422 = scalar_lea.sflag [#allocation7], %s421
          %s423 = sand.u32 %s157, 1
          %s424 = scalar_lea.vmem [#allocation6], %s423
          %425 = dma.done %s422, 16
        $region60: #{tpu_custom_call.1} parent=51 // pred_fallthru
          _
        // Predicated region
        $region61: #{tpu_custom_call.1} parent=51 // pred_check
          %p426 = pneg %p200
        $region62: #{tpu_custom_call.1} parent=51 // pred_check_branch
          %428 = sbr.rel (%p426) target = $region64
        $region63: #{tpu_custom_call.1} parent=51 // pred_region
          %s429 = sand.u32 %s27, 1
          %s430 = scalar_lea.sflag [#allocation7], %s429
          %s431 = sand.u32 %s185, 1
          %s432 = scalar_lea.vmem [#allocation8], %s431
          %433 = dma.done %s430, 16
        $region64: #{tpu_custom_call.1} parent=51 // pred_fallthru
          _
      $region52: #{tpu_custom_call.1} parent=5 // pred_fallthru
        _
    $region6: #{tpu_custom_call.1} parent=1 // loop_footer
      %s25 = sadd.s32 1, %s21
    $region7: #{tpu_custom_call.1} parent=1 // loop_footer_branch
      %20 = sbr.rel target = $region3
    $region8: #{tpu_custom_call.1} parent=1 // loop_exit
      _
    %434 = vsyncpa [#allocation3], 1
    %s435 = scalar_lea.sflag [#allocation3], 1
    %436 = vsyncpa %s435, 1
    %437 = vsyncpa [#allocation4], 1
    %s438 = scalar_lea.sflag [#allocation4], 1
    %439 = vsyncpa %s438, 1
    %440 = vsyncpa [#allocation7], 1
    %s441 = scalar_lea.sflag [#allocation7], 1
    %442 = vsyncpa %s441, 1

</llo_original>
